<compile_context>
chip_gen: v7x
topology: tpu7x:2x2x1
jax: 0.10.0
libtpu: 0.0.40
codegen_flags: <defaults>
</compile_context>

<pallas_src>
import functools

import numpy as np

import jax
import jax.numpy as jnp
from jax import lax
from jax.experimental import pallas as pl
from jax.experimental.pallas import tpu as pltpu

P_DROP = 0.05

_LANES = 128
_SUBLANES_I8 = 32          # int8 native tiling is (32, 128)
_TILE_ROWS = 512           # 512 * 128 = 65_536 edges per grid step


def _i32(v):
    """Python int -> two's-complement int32 value (as a Python int)."""
    v &= 0xFFFFFFFF
    return v - (1 << 32) if v >= (1 << 31) else v


_GOLD = _i32(0x9E3779B9)
_MIX1 = _i32(0x7FEB352D)
_MIX2 = _i32(0x846CA68B)


def _srl(x, n):
    """Logical right shift for int32 (arithmetic shift, then mask sign fill)."""
    return (x >> n) & jnp.int32((1 << (32 - n)) - 1)


def _edge_drop_mask_kernel(seed_ref, mask_ref, *, tile_rows, n_edges, thresh24):
    """Writes one lane-dense (tile_rows, 128) int8 tile of the keep mask.

    keep[e] = 1  <=>  hash(seed, e) in [0, 2^24) is >= round(p * 2^24),
    and e < n_edges (padding tail is always marked dropped).
    """
    pid = pl.program_id(0)
    seed = seed_ref[0]

    row = lax.broadcasted_iota(jnp.int32, (tile_rows, _LANES), 0)
    col = lax.broadcasted_iota(jnp.int32, (tile_rows, _LANES), 1)
    gid = (pid * tile_rows + row) * _LANES + col          # global edge id

    # Stateless counter hash: splitmix / lowbias32-style mixer, pure VPU
    # int32 ops (xor / mul / shift).  (seed + 1) * GOLD avoids the hash(0)=0
    # fixed point for seed == 0.
    x = gid ^ ((seed + jnp.int32(1)) * jnp.int32(_GOLD))
    x = x ^ _srl(x, 16)
    x = x * jnp.int32(_MIX1)
    x = x ^ _srl(x, 15)
    x = x * jnp.int32(_MIX2)
    x = x ^ _srl(x, 16)

    u24 = x & jnp.int32(0x00FFFFFF)                       # uniform in [0, 2^24)
    keep = jnp.logical_and(u24 >= jnp.int32(thresh24), gid < n_edges)
    mask_ref[...] = keep.astype(jnp.int8)


def _round_up(v, m):
    return ((v + m - 1) // m) * m


def edge_drop_keep_mask(n_edges, seed, p=P_DROP, tile_rows=_TILE_ROWS):
    """Pallas hot path: per-edge keep mask as a lane-dense (rows, 128) int8 array."""
    rows_needed = max(1, -(-n_edges // _LANES))
    tile_rows = min(tile_rows, _round_up(rows_needed, _SUBLANES_I8))
    rows_padded = _round_up(rows_needed, tile_rows)
    num_tiles = rows_padded // tile_rows
    thresh24 = min(1 << 24, max(0, int(round(p * float(1 << 24)))))

    kernel = functools.partial(
        _edge_drop_mask_kernel,
        tile_rows=tile_rows,
        n_edges=n_edges,
        thresh24=thresh24,
    )

    mask2d = pl.pallas_call(
        kernel,
        out_shape=jax.ShapeDtypeStruct((rows_padded, _LANES), jnp.int8),
        grid=(num_tiles,),
        in_specs=[pl.BlockSpec(memory_space=pltpu.MemorySpace.SMEM)],   # seed scalar
        out_specs=pl.BlockSpec((tile_rows, _LANES), lambda i: (i, 0)),
        compiler_params=pltpu.CompilerParams(
            dimension_semantics=("parallel",)),
    )(seed)
    return mask2d


def edge_drop(data, seed, p=P_DROP):
    """Returns a dict mirroring tg.data.Data: passthrough fields plus the
    compacted (order-preserving) edge_index padded to full length and the
    kept-edge count."""
    edge_index = data["edge_index"]
    two, n_edges = edge_index.shape
    assert two == 2

    mask2d = edge_drop_keep_mask(n_edges, seed, p)
    keep = mask2d.reshape(-1)[:n_edges].astype(bool)

    # O(E) cumsum + scatter compaction (stable, preserves original order).
    csum = jnp.cumsum(keep.astype(jnp.int32))
    count = csum[-1]
    dest = jnp.where(keep, csum - 1, n_edges)          # dropped edges -> OOB index
    compacted = jnp.full((2, n_edges), -1, edge_index.dtype)
    compacted = compacted.at[:, dest].set(edge_index, mode="drop")

    # TODO(synk): a dynamically-shaped (2, E_kept) output cannot be expressed
    # with static shapes under jit; the final slice uses `num_kept_edges`
    # host-side.
    return {
        "x": data["x"],
        "y": data["y"],
        "train_mask": data["train_mask"],
        "test_mask": data["test_mask"],
        "edge_index_padded": compacted,
        "num_kept_edges": count,
        "keep_mask": keep,
    }


if __name__ == "__main__":
    key = jax.random.PRNGKey(0)
    N_NODES, N_FEAT, N_EDGES = 32, 16, 300
    kx, ky, ke = jax.random.split(key, 3)

    data = {
        "x": jax.random.normal(kx, (N_NODES, N_FEAT), dtype=jnp.float32),
        "y": jax.random.randint(ky, (N_NODES,), 0, 4, dtype=jnp.int32),
        "train_mask": jnp.arange(N_NODES) < N_NODES // 2,
        "test_mask": jnp.arange(N_NODES) >= N_NODES // 2,
        "edge_index": jax.random.randint(ke, (2, N_EDGES), 0, N_NODES,
                                         dtype=jnp.int32),
    }
    seed = jnp.array([0], dtype=jnp.int32)

    out = edge_drop(data, seed, P_DROP)
    jax.block_until_ready(out)

    keep_np = np.asarray(out["keep_mask"])
    n_keep = int(out["num_kept_edges"])
    new_edge_index = np.asarray(out["edge_index_padded"])[:, :n_keep]

    # Sanity checks.
    assert 0 <= n_keep <= N_EDGES
    assert n_keep == int(keep_np.sum())
    ref = np.asarray(data["edge_index"])[:, keep_np]        # reference compaction
    assert new_edge_index.shape == ref.shape
    assert np.array_equal(new_edge_index, ref)
    assert n_keep > N_EDGES // 2                            # p = 0.05 keeps most edges
    # Passthrough fields untouched.
    assert out["x"].shape == (N_NODES, N_FEAT)
    assert out["y"].shape == (N_NODES,)
    assert out["train_mask"].shape == (N_NODES,)
    assert out["test_mask"].shape == (N_NODES,)

    print("KERNEL_OK")
</pallas_src>

<mosaic_0001>
module attributes {stable_mosaic.version = 11 : i64} {
  func.func @_edge_drop_mask_kernel(%arg0: i32, %arg1: memref<1xi32, #tpu.memory_space<smem>>, %arg2: memref<32x128xi8, #tpu.memory_space<vmem>>) attributes {dimension_semantics = [#tpu.dimension_semantics<parallel>], iteration_bounds = array<i64: 1>, scalar_prefetch = 0 : i64, scratch_operands = 0 : i64, tpu.core_type = #tpu.core_type<tc>, window_params = [{transform_indices = @transform_0, window_bounds = array<i64: 1>}, {transform_indices = @transform_1, window_bounds = array<i64: 32, 128>}]} {
    %c0 = arith.constant 0 : index
    %0 = memref.load %arg1[%c0] : memref<1xi32, #tpu.memory_space<smem>>
    %1 = tpu.iota {dimensions = array<i32: 0>} : vector<32x128xi32>
    %2 = tpu.iota {dimensions = array<i32: 1>} : vector<32x128xi32>
    %c32_i32 = arith.constant 32 : i32
    %3 = arith.muli %arg0, %c32_i32 : i32
    %4 = vector.broadcast %3 : i32 to vector<32x128xi32>
    %5 = arith.addi %4, %1 : vector<32x128xi32>
    %c128_i32 = arith.constant 128 : i32
    %6 = vector.broadcast %c128_i32 : i32 to vector<32x128xi32>
    %7 = arith.muli %5, %6 : vector<32x128xi32>
    %8 = arith.addi %7, %2 : vector<32x128xi32>
    %c1_i32 = arith.constant 1 : i32
    %9 = arith.addi %0, %c1_i32 : i32
    %c-1640531527_i32 = arith.constant -1640531527 : i32
    %10 = arith.muli %9, %c-1640531527_i32 : i32
    %11 = vector.broadcast %10 : i32 to vector<32x128xi32>
    %12 = arith.xori %8, %11 : vector<32x128xi32>
    %c16_i32 = arith.constant 16 : i32
    %13 = vector.broadcast %c16_i32 : i32 to vector<32x128xi32>
    %14 = arith.shrsi %12, %13 : vector<32x128xi32>
    %c65535_i32 = arith.constant 65535 : i32
    %15 = vector.broadcast %c65535_i32 : i32 to vector<32x128xi32>
    %16 = arith.andi %14, %15 : vector<32x128xi32>
    %17 = arith.xori %12, %16 : vector<32x128xi32>
    %c2146121005_i32 = arith.constant 2146121005 : i32
    %18 = vector.broadcast %c2146121005_i32 : i32 to vector<32x128xi32>
    %19 = arith.muli %17, %18 : vector<32x128xi32>
    %c15_i32 = arith.constant 15 : i32
    %20 = vector.broadcast %c15_i32 : i32 to vector<32x128xi32>
    %21 = arith.shrsi %19, %20 : vector<32x128xi32>
    %c131071_i32 = arith.constant 131071 : i32
    %22 = vector.broadcast %c131071_i32 : i32 to vector<32x128xi32>
    %23 = arith.andi %21, %22 : vector<32x128xi32>
    %24 = arith.xori %19, %23 : vector<32x128xi32>
    %c-2073254261_i32 = arith.constant -2073254261 : i32
    %25 = vector.broadcast %c-2073254261_i32 : i32 to vector<32x128xi32>
    %26 = arith.muli %24, %25 : vector<32x128xi32>
    %c16_i32_0 = arith.constant 16 : i32
    %27 = vector.broadcast %c16_i32_0 : i32 to vector<32x128xi32>
    %28 = arith.shrsi %26, %27 : vector<32x128xi32>
    %c65535_i32_1 = arith.constant 65535 : i32
    %29 = vector.broadcast %c65535_i32_1 : i32 to vector<32x128xi32>
    %30 = arith.andi %28, %29 : vector<32x128xi32>
    %31 = arith.xori %26, %30 : vector<32x128xi32>
    %c16777215_i32 = arith.constant 16777215 : i32
    %32 = vector.broadcast %c16777215_i32 : i32 to vector<32x128xi32>
    %33 = arith.andi %31, %32 : vector<32x128xi32>
    %c838861_i32 = arith.constant 838861 : i32
    %34 = vector.broadcast %c838861_i32 : i32 to vector<32x128xi32>
    %35 = arith.cmpi sge, %33, %34 : vector<32x128xi32>
    %c300_i32 = arith.constant 300 : i32
    %36 = vector.broadcast %c300_i32 : i32 to vector<32x128xi32>
    %37 = arith.cmpi slt, %8, %36 : vector<32x128xi32>
    %38 = arith.andi %35, %37 : vector<32x128xi1>
    %39 = arith.extui %38 : vector<32x128xi1> to vector<32x128xi8>
    %c0_2 = arith.constant 0 : index
    %c0_3 = arith.constant 0 : index
    %40 = vector.load %arg2[%c0_2, %c0_3] : memref<32x128xi8, #tpu.memory_space<vmem>>, vector<32x128xi8>
    tpu.vector_store %arg2[%c0_2, %c0_3], %39 {strides = array<i32>} : memref<32x128xi8, #tpu.memory_space<vmem>>, vector<32x128xi8>,
    return
  }
  func.func @transform_0(%arg0: i32) -> i32 {
    %c0_i32 = arith.constant 0 : i32
    %c0_i32_0 = arith.constant 0 : i32
    return %c0_i32 : i32
  }
  func.func @transform_1(%arg0: i32) -> (i32, i32) {
    %c0_i32 = arith.constant 0 : i32
    %c0_i32_0 = arith.constant 0 : i32
    return %arg0, %c0_i32 : i32, i32
  }
}

</mosaic_0001>

<llo_original>
// kernel: tpu_custom_call.1
$region0: #{tpu_custom_call.1}
  #allocation0 [shape = 'u32[]', space=smem, size = 0x4, offset = 0x4, fixed_abs, tag = 'smem constant byte address 0x4 - core index']
  #allocation1 [shape = 'u32[144,128]{1,0:T(1,128)}', space=vmem, size = 0x12000, scoped, tag = 'internal scratch']
  #allocation2 [shape = 's32[1]{0:T(128)S(6)}', space=smem, size = 0x200, scoped, tag = 'scoped memory for tpu_custom_call.1']
  %s0 = inlined_call_operand.<no memory space> [shape: s32[1], index: 0, kind: input, shape index: {}]
  %s1 = inlined_call_operand.hbm [shape: s8[32,128], index: 1, kind: output, shape index: {}]
  %s2 = sld [smem:[#allocation0]]
  $region14: #{tpu_custom_call.1} parent=0
    _
  %s4 = ssub.s32 1, %s2
  %s5 = scalar_select 0, %s4, %s2
  %6 = sst [smem:[#allocation2]] %s0
  $region1: #{tpu_custom_call.1} parent=0
    #allocation3 [shape = 'u8[4096]{0}', space=vmem, size = 0x1000, scoped, tag = 'output window, operand 0, single buffered']
    #allocation4 [shape = 's32[1]{0}', space=sflag, size = 0x4, scoped, tag = 'scoped memory for tpu_custom_call.1']
    %7 = vsyncpa [#allocation4], 0
    // Predicated region
    $region2: #{tpu_custom_call.1} parent=1 // pred_check
      _
    $region3: #{tpu_custom_call.1} parent=1 // pred_check_branch
      %9 = sbr.rel (0) target = $region5
    $region4: #{tpu_custom_call.1} parent=1 // pred_region
      _
    $region5: #{tpu_custom_call.1} parent=1 // pred_fallthru
      _
    %s12 = sld [smem:[#allocation2]]
    %v13 = vlaneseq
    %v14 = vshrl.u32 %v13, 7
    %v15 = vadd.s32 %v14, 8
    %v16 = vadd.s32 %v14, 16
    %v17 = vadd.s32 %v14, 24
    %v18 = vlaneseq
    %v19 = vand.u32 %v18, 127
    %s20 = smul.u32 0, 32
    %v21 = vstv %s20
    %v22 = vadd.s32 %v21, %v14
    %v23 = vadd.s32 %v21, %v15
    %v24 = vadd.s32 %v21, %v16
    %v25 = vadd.s32 %v21, %v17
    %v26 = vmul.u32 %v22, 128
    %v27 = vmul.u32 %v23, 128
    %v28 = vmul.u32 %v24, 128
    %v29 = vmul.u32 %v25, 128
    %v30 = vadd.s32 %v26, %v19
    %v31 = vadd.s32 %v27, %v19
    %v32 = vadd.s32 %v28, %v19
    %v33 = vadd.s32 %v29, %v19
    %s34 = sadd.s32 %s12, 1
    %s35 = smul.u32 %s34, 2654435769
    %v36 = vstv %s35
    %v37 = vxor.u32 %v30, %v36
    %v38 = vxor.u32 %v31, %v36
    %v39 = vxor.u32 %v32, %v36
    %v40 = vxor.u32 %v33, %v36
    %v41 = vshra.s32 %v37, 16
    %v42 = vshra.s32 %v38, 16
    %v43 = vshra.s32 %v39, 16
    %v44 = vshra.s32 %v40, 16
    %v45 = vand.u32 %v41, 65535
    %v46 = vand.u32 %v42, 65535
    %v47 = vand.u32 %v43, 65535
    %v48 = vand.u32 %v44, 65535
    %v49 = vxor.u32 %v37, %v45
    %v50 = vxor.u32 %v38, %v46
    %v51 = vxor.u32 %v39, %v47
    %v52 = vxor.u32 %v40, %v48
    %v53 = vmul.u32 %v49, 2146121005
    %v54 = vmul.u32 %v50, 2146121005
    %v55 = vmul.u32 %v51, 2146121005
    %v56 = vmul.u32 %v52, 2146121005
    %v57 = vshra.s32 %v53, 15
    %v58 = vshra.s32 %v54, 15
    %v59 = vshra.s32 %v55, 15
    %v60 = vshra.s32 %v56, 15
    %v61 = vand.u32 %v57, 131071
    %v62 = vand.u32 %v58, 131071
    %v63 = vand.u32 %v59, 131071
    %v64 = vand.u32 %v60, 131071
    %v65 = vxor.u32 %v53, %v61
    %v66 = vxor.u32 %v54, %v62
    %v67 = vxor.u32 %v55, %v63
    %v68 = vxor.u32 %v56, %v64
    %v69 = vmul.u32 %v65, 2221713035
    %v70 = vmul.u32 %v66, 2221713035
    %v71 = vmul.u32 %v67, 2221713035
    %v72 = vmul.u32 %v68, 2221713035
    %v73 = vshra.s32 %v69, 16
    %v74 = vshra.s32 %v70, 16
    %v75 = vshra.s32 %v71, 16
    %v76 = vshra.s32 %v72, 16
    %v77 = vand.u32 %v73, 65535
    %v78 = vand.u32 %v74, 65535
    %v79 = vand.u32 %v75, 65535
    %v80 = vand.u32 %v76, 65535
    %v81 = vxor.u32 %v69, %v77
    %v82 = vxor.u32 %v70, %v78
    %v83 = vxor.u32 %v71, %v79
    %v84 = vxor.u32 %v72, %v80
    %v85 = vand.u32 %v81, 16777215
    %v86 = vand.u32 %v82, 16777215
    %v87 = vand.u32 %v83, 16777215
    %v88 = vand.u32 %v84, 16777215
    %vm89 = vcmp.ge.s32.totalorder %v85, 838861
    %vm90 = vcmp.ge.s32.totalorder %v86, 838861
    %vm91 = vcmp.ge.s32.totalorder %v87, 838861
    %vm92 = vcmp.ge.s32.totalorder %v88, 838861
    %vm93 = vcmp.lt.s32.totalorder %v30, 300
    %vm94 = vcmp.lt.s32.totalorder %v31, 300
    %vm95 = vcmp.lt.s32.totalorder %v32, 300
    %vm96 = vcmp.lt.s32.totalorder %v33, 300
    %vm97 = vmand %vm89, %vm93
    %vm98 = vmand %vm90, %vm94
    %vm99 = vmand %vm91, %vm95
    %vm100 = vmand %vm92, %vm96
    %vm101 = vmpackc.low %vm98, %vm97
    %vm102 = vmpackc.low %vm100, %vm99
    %vm103 = vmpackc.even %vm102, %vm101
    %v104 = vsel %vm103, 16843009, 0
    %105 = vst [vmem:[#allocation3] sm:$0xff] %v104
    // Predicated region
    $region6: #{tpu_custom_call.1} parent=1 // pred_check
      _
    $region7: #{tpu_custom_call.1} parent=1 // pred_check_branch
      %107 = sbr.rel (0) target = $region9
    $region8: #{tpu_custom_call.1} parent=1 // pred_region
      %s109 = ssub.s32 128, 128
      %110 = vsyncadd [#allocation4], %s109
      %s112 = sshll.u32 [#allocation3], 4
      %s113 = int_to_ptr.vmem [resolvable:$true] %s112
      %115 = dma.vmem_to_hbm [thread:$0]  %s113, 128, %s1, [#allocation4]
    $region9: #{tpu_custom_call.1} parent=1 // pred_fallthru
      _
    // Predicated region
    $region10: #{tpu_custom_call.1} parent=1 // pred_check
      _
    $region11: #{tpu_custom_call.1} parent=1 // pred_check_branch
      %117 = sbr.rel (0) target = $region13
    $region12: #{tpu_custom_call.1} parent=1 // pred_region
      %118 = dma.done [#allocation4], 128
    $region13: #{tpu_custom_call.1} parent=1 // pred_fallthru
      _
    %119 = vsyncpa [#allocation4], 1

</llo_original>
